<compile_context>
chip_gen: v7x
topology: tpu7x:2x2x1
jax: 0.10.0
libtpu: 0.0.40
codegen_flags: <defaults>
</compile_context>

<pallas_src>
import math

import jax
import jax.numpy as jnp
from jax.experimental import pallas as pl
from jax.experimental.pallas import tpu as pltpu

_LOG_ADJUST = -math.log(1e-6)  # 13.8155...
_RGB_FROM_HED = (
    (0.65, 0.70, 0.29),
    (0.07, 0.99, 0.11),
    (0.27, 0.57, 0.78),
)
# Folded coefficients: log_rgb[j] = sum_c stains[c] * (-log_adjust * M[c, j])
_COEF = tuple(
    tuple(-_LOG_ADJUST * _RGB_FROM_HED[c][j] for j in range(3)) for c in range(3)
)

_LANE = 128        # lane width
_MAX_ROWS = 1024   # rows of 128 lanes per block -> 3*1024*128*4B = 1.5 MiB/block


def _hed2rgb_kernel(x_ref, o_ref):
    # x_ref / o_ref block: (BN, 3, TR, 128); channel axis (3 stains) is static.
    s0 = x_ref[:, 0, :, :].astype(jnp.float32)   # (BN, TR, 128)
    s1 = x_ref[:, 1, :, :].astype(jnp.float32)
    s2 = x_ref[:, 2, :, :].astype(jnp.float32)
    for j in range(3):  # unrolled: static output-channel index
        log_rgb = s0 * _COEF[0][j] + s1 * _COEF[1][j] + s2 * _COEF[2][j]
        o_ref[:, j, :, :] = jnp.clip(jnp.exp(log_rgb), 0.0, 1.0)


@jax.jit
def hed2rgb(x):
    """x: (N, 3, H, W) HED stains -> (N, 3, H, W) RGB in [0, 1] (float32)."""
    N, C, H, W = x.shape
    assert C == 3, "hed2rgb expects 3 stain channels"
    HW = H * W

    rows_raw = pl.cdiv(HW, _LANE)
    if rows_raw <= _MAX_ROWS:
        tr = rows_raw                  # full extent (valid even if not % 8)
        rows = rows_raw
        # Batch several images per block to amortize the ~0.35us/step overhead.
        bn = max(1, min(N, _MAX_ROWS // max(rows, 1)))
        while N % bn:
            bn -= 1
    else:
        tr = _MAX_ROWS
        rows = pl.cdiv(rows_raw, tr) * tr
        bn = 1

    hw_pad = rows * _LANE
    x_flat = x.reshape(N, 3, HW)
    if hw_pad != HW:
        # Zero-pad flattened spatial dim up to whole 128-lane rows (sliced off below).
        x_flat = jnp.pad(x_flat, ((0, 0), (0, 0), (0, hw_pad - HW)))
    x4 = x_flat.reshape(N, 3, rows, _LANE)

    grid = (N // bn, rows // tr)
    out4 = pl.pallas_call(
        _hed2rgb_kernel,
        out_shape=jax.ShapeDtypeStruct((N, 3, rows, _LANE), jnp.float32),
        grid=grid,
        in_specs=[pl.BlockSpec((bn, 3, tr, _LANE), lambda n, r: (n, 0, r, 0))],
        out_specs=pl.BlockSpec((bn, 3, tr, _LANE), lambda n, r: (n, 0, r, 0)),
        compiler_params=pltpu.CompilerParams(
            dimension_semantics=("parallel", "parallel")),
    )(x4)

    return out4.reshape(N, 3, hw_pad)[:, :, :HW].reshape(N, 3, H, W)


def _reference(x):
    """Pure-JAX reference of combine_stains (spec-faithful)."""
    la = jnp.float32(_LOG_ADJUST)
    m = jnp.asarray(_RGB_FROM_HED, jnp.float32)
    s = jnp.transpose(x.astype(jnp.float32), (0, 2, 3, 1))   # b h w c
    log_rgb = jnp.einsum("bhwc,cj->bhwj", -(s * la), m,
                         precision=jax.lax.Precision.HIGHEST)
    rgb = jnp.transpose(jnp.exp(log_rgb), (0, 3, 1, 2))       # b c h w
    return jnp.clip(rgb, 0.0, 1.0)


if __name__ == "__main__":
    key = jax.random.PRNGKey(0)
    N, C, H, W = 2, 3, 16, 16
    # Stain-concentration-like inputs (small, non-negative).
    x = jnp.abs(jax.random.normal(key, (N, C, H, W), dtype=jnp.float32)) * 0.05

    out = hed2rgb(x)
    jax.block_until_ready(out)

    ref = _reference(x)
    assert out.shape == (N, C, H, W)
    assert bool(jnp.allclose(out, ref, atol=1e-4, rtol=1e-4)), "mismatch vs reference"
    print("KERNEL_OK")
</pallas_src>

<mosaic_0001>
module attributes {stable_mosaic.version = 11 : i64} {
  func.func @_hed2rgb_kernel(%arg0: i32, %arg1: i32, %arg2: memref<2x3x2x128xf32, #tpu.memory_space<vmem>>, %arg3: memref<2x3x2x128xf32, #tpu.memory_space<vmem>>) attributes {dimension_semantics = [#tpu.dimension_semantics<parallel>, #tpu.dimension_semantics<parallel>], iteration_bounds = array<i64: 1, 1>, scalar_prefetch = 0 : i64, scratch_operands = 0 : i64, tpu.core_type = #tpu.core_type<tc>, window_params = [{transform_indices = @transform_0, window_bounds = array<i64: 2, 3, 2, 128>}, {transform_indices = @transform_1, window_bounds = array<i64: 2, 3, 2, 128>}]} {
    %c0 = arith.constant 0 : index
    %c0_0 = arith.constant 0 : index
    %c0_1 = arith.constant 0 : index
    %c0_2 = arith.constant 0 : index
    %0 = vector.load %arg2[%c0, %c0_0, %c0_1, %c0_2] : memref<2x3x2x128xf32, #tpu.memory_space<vmem>>, vector<2x1x2x128xf32>
    %1 = vector.shape_cast %0 : vector<2x1x2x128xf32> to vector<2x2x128xf32>
    %c0_3 = arith.constant 0 : index
    %c1 = arith.constant 1 : index
    %c0_4 = arith.constant 0 : index
    %c0_5 = arith.constant 0 : index
    %2 = vector.load %arg2[%c0_3, %c1, %c0_4, %c0_5] : memref<2x3x2x128xf32, #tpu.memory_space<vmem>>, vector<2x1x2x128xf32>
    %3 = vector.shape_cast %2 : vector<2x1x2x128xf32> to vector<2x2x128xf32>
    %c0_6 = arith.constant 0 : index
    %c2 = arith.constant 2 : index
    %c0_7 = arith.constant 0 : index
    %c0_8 = arith.constant 0 : index
    %4 = vector.load %arg2[%c0_6, %c2, %c0_7, %c0_8] : memref<2x3x2x128xf32, #tpu.memory_space<vmem>>, vector<2x1x2x128xf32>
    %5 = vector.shape_cast %4 : vector<2x1x2x128xf32> to vector<2x2x128xf32>
    %cst = arith.constant -8.98008155 : f32
    %6 = vector.broadcast %cst : f32 to vector<2x2x128xf32>
    %7 = arith.mulf %1, %6 : vector<2x2x128xf32>
    %cst_9 = arith.constant -0.967085719 : f32
    %8 = vector.broadcast %cst_9 : f32 to vector<2x2x128xf32>
    %9 = arith.mulf %3, %8 : vector<2x2x128xf32>
    %10 = arith.addf %7, %9 : vector<2x2x128xf32>
    %cst_10 = arith.constant -3.73018789 : f32
    %11 = vector.broadcast %cst_10 : f32 to vector<2x2x128xf32>
    %12 = arith.mulf %5, %11 : vector<2x2x128xf32>
    %13 = arith.addf %10, %12 : vector<2x2x128xf32>
    %14 = math.exp %13 : vector<2x2x128xf32>
    %cst_11 = arith.constant 0.000000e+00 : f32
    %cst_12 = arith.constant 1.000000e+00 : f32
    %15 = vector.broadcast %cst_11 : f32 to vector<2x2x128xf32>
    %16 = arith.maximumf %15, %14 : vector<2x2x128xf32>
    %17 = vector.broadcast %cst_12 : f32 to vector<2x2x128xf32>
    %18 = arith.minimumf %17, %16 : vector<2x2x128xf32>
    %c0_13 = arith.constant 0 : index
    %c0_14 = arith.constant 0 : index
    %c0_15 = arith.constant 0 : index
    %c0_16 = arith.constant 0 : index
    %19 = vector.load %arg3[%c0_13, %c0_14, %c0_15, %c0_16] : memref<2x3x2x128xf32, #tpu.memory_space<vmem>>, vector<2x1x2x128xf32>
    %20 = vector.shape_cast %19 : vector<2x1x2x128xf32> to vector<2x2x128xf32>
    %21 = vector.shape_cast %18 : vector<2x2x128xf32> to vector<2x1x2x128xf32>
    tpu.vector_store %arg3[%c0_13, %c0_14, %c0_15, %c0_16], %21 {strides = array<i32>} : memref<2x3x2x128xf32, #tpu.memory_space<vmem>>, vector<2x1x2x128xf32>,
    %cst_17 = arith.constant -9.67085742 : f32
    %22 = vector.broadcast %cst_17 : f32 to vector<2x2x128xf32>
    %23 = arith.mulf %1, %22 : vector<2x2x128xf32>
    %cst_18 = arith.constant -13.6773558 : f32
    %24 = vector.broadcast %cst_18 : f32 to vector<2x2x128xf32>
    %25 = arith.mulf %3, %24 : vector<2x2x128xf32>
    %26 = arith.addf %23, %25 : vector<2x2x128xf32>
    %cst_19 = arith.constant -7.87484121 : f32
    %27 = vector.broadcast %cst_19 : f32 to vector<2x2x128xf32>
    %28 = arith.mulf %5, %27 : vector<2x2x128xf32>
    %29 = arith.addf %26, %28 : vector<2x2x128xf32>
    %30 = math.exp %29 : vector<2x2x128xf32>
    %cst_20 = arith.constant 0.000000e+00 : f32
    %cst_21 = arith.constant 1.000000e+00 : f32
    %31 = vector.broadcast %cst_20 : f32 to vector<2x2x128xf32>
    %32 = arith.maximumf %31, %30 : vector<2x2x128xf32>
    %33 = vector.broadcast %cst_21 : f32 to vector<2x2x128xf32>
    %34 = arith.minimumf %33, %32 : vector<2x2x128xf32>
    %c0_22 = arith.constant 0 : index
    %c1_23 = arith.constant 1 : index
    %c0_24 = arith.constant 0 : index
    %c0_25 = arith.constant 0 : index
    %35 = vector.load %arg3[%c0_22, %c1_23, %c0_24, %c0_25] : memref<2x3x2x128xf32, #tpu.memory_space<vmem>>, vector<2x1x2x128xf32>
    %36 = vector.shape_cast %35 : vector<2x1x2x128xf32> to vector<2x2x128xf32>
    %37 = vector.shape_cast %34 : vector<2x2x128xf32> to vector<2x1x2x128xf32>
    tpu.vector_store %arg3[%c0_22, %c1_23, %c0_24, %c0_25], %37 {strides = array<i32>} : memref<2x3x2x128xf32, #tpu.memory_space<vmem>>, vector<2x1x2x128xf32>,
    %cst_26 = arith.constant -4.00649786 : f32
    %38 = vector.broadcast %cst_26 : f32 to vector<2x2x128xf32>
    %39 = arith.mulf %1, %38 : vector<2x2x128xf32>
    %cst_27 = arith.constant -1.51970613 : f32
    %40 = vector.broadcast %cst_27 : f32 to vector<2x2x128xf32>
    %41 = arith.mulf %3, %40 : vector<2x2x128xf32>
    %42 = arith.addf %39, %41 : vector<2x2x128xf32>
    %cst_28 = arith.constant -10.7760983 : f32
    %43 = vector.broadcast %cst_28 : f32 to vector<2x2x128xf32>
    %44 = arith.mulf %5, %43 : vector<2x2x128xf32>
    %45 = arith.addf %42, %44 : vector<2x2x128xf32>
    %46 = math.exp %45 : vector<2x2x128xf32>
    %cst_29 = arith.constant 0.000000e+00 : f32
    %cst_30 = arith.constant 1.000000e+00 : f32
    %47 = vector.broadcast %cst_29 : f32 to vector<2x2x128xf32>
    %48 = arith.maximumf %47, %46 : vector<2x2x128xf32>
    %49 = vector.broadcast %cst_30 : f32 to vector<2x2x128xf32>
    %50 = arith.minimumf %49, %48 : vector<2x2x128xf32>
    %c0_31 = arith.constant 0 : index
    %c2_32 = arith.constant 2 : index
    %c0_33 = arith.constant 0 : index
    %c0_34 = arith.constant 0 : index
    %51 = vector.load %arg3[%c0_31, %c2_32, %c0_33, %c0_34] : memref<2x3x2x128xf32, #tpu.memory_space<vmem>>, vector<2x1x2x128xf32>
    %52 = vector.shape_cast %51 : vector<2x1x2x128xf32> to vector<2x2x128xf32>
    %53 = vector.shape_cast %50 : vector<2x2x128xf32> to vector<2x1x2x128xf32>
    tpu.vector_store %arg3[%c0_31, %c2_32, %c0_33, %c0_34], %53 {strides = array<i32>} : memref<2x3x2x128xf32, #tpu.memory_space<vmem>>, vector<2x1x2x128xf32>,
    return
  }
  func.func @transform_0(%arg0: i32, %arg1: i32) -> (i32, i32, i32, i32) {
    %c0_i32 = arith.constant 0 : i32
    %c0_i32_0 = arith.constant 0 : i32
    %c0_i32_1 = arith.constant 0 : i32
    return %arg0, %c0_i32, %arg1, %c0_i32_0 : i32, i32, i32, i32
  }
  func.func @transform_1(%arg0: i32, %arg1: i32) -> (i32, i32, i32, i32) {
    %c0_i32 = arith.constant 0 : i32
    %c0_i32_0 = arith.constant 0 : i32
    %c0_i32_1 = arith.constant 0 : i32
    return %arg0, %c0_i32, %arg1, %c0_i32_0 : i32, i32, i32, i32
  }
}

</mosaic_0001>

<llo_original>
// kernel: hed2rgb.1
$region0: #{hed2rgb.1}
  #allocation0 [shape = 'u32[]', space=smem, size = 0x4, offset = 0x4, fixed_abs, tag = 'smem constant byte address 0x4 - core index']
  #allocation1 [shape = 'u32[144,128]{1,0:T(1,128)}', space=vmem, size = 0x12000, scoped, tag = 'internal scratch']
  %s0 = inlined_call_operand.vmem [shape: f32[2,3,2,128], index: 0, kind: input, shape index: {}]
  %s1 = inlined_call_operand.vmem [shape: f32[2,3,2,128], index: 1, kind: output, shape index: {}]
  %s2 = sld [smem:[#allocation0]]
  $region14: #{hed2rgb.1} parent=0
    _
  %s4 = ssub.s32 1, %s2
  %s5 = scalar_select 0, %s4, %s2
  // Predicated region
  $region2: #{hed2rgb.1} parent=0 // pred_check
    _
  $region3: #{hed2rgb.1} parent=0 // pred_check_branch
    %7 = sbr.rel (0) target = $region5
  $region4: #{hed2rgb.1} parent=0 // pred_region
    _
  $region5: #{hed2rgb.1} parent=0 // pred_fallthru
    _
  %v8 = vld [vmem:[%s0] sm:$0x3]
  %v9 = vld [vmem:[%s0 + $0x6] sm:$0x3]
  %s10 = scalar_lea.vmem %s0, 2
  %v11 = vld [vmem:[%s10] sm:$0x3]
  %v12 = vld [vmem:[%s10 + $0x6] sm:$0x3]
  %s13 = scalar_lea.vmem %s0, 4
  %v14 = vld [vmem:[%s13] sm:$0x3]
  %v15 = vld [vmem:[%s13 + $0x6] sm:$0x3]
  %v16 = vmul.f32 %v8, -8.980082
  %v17 = vmul.f32 %v9, -8.980082
  %v18 = vmul.f32 %v11, -0.9670857
  %v19 = vmul.f32 %v12, -0.9670857
  %v20 = vadd.f32 %v16, %v18
  %v21 = vadd.f32 %v17, %v19
  %v22 = vmul.f32 %v14, -3.730188
  %v23 = vmul.f32 %v15, -3.730188
  %v24 = vadd.f32 %v20, %v22
  %v25 = vadd.f32 %v21, %v23
  %v26 = vmul.f32 %v24, 1.442695
  %v27 = vpow.pop %v26
  %v28 = vmul.f32 %v25, 1.442695
  %v29 = vpow.pop %v28
  %v30 = vmax.f32 %v27, 0.0
  %v31 = vmax.f32 %v29, 0.0
  %v32 = vmin.f32 %v30, 1.0
  %v33 = vmin.f32 %v31, 1.0
  %34 = vst [vmem:[%s1] sm:$0x3] %v32
  %35 = vst [vmem:[%s1 + $0x6] sm:$0x3] %v33
  %v36 = vmul.f32 %v8, -9.670857
  %v37 = vmul.f32 %v9, -9.670857
  %v38 = vmul.f32 %v11, -13.677356
  %v39 = vmul.f32 %v12, -13.677356
  %v40 = vadd.f32 %v36, %v38
  %v41 = vadd.f32 %v37, %v39
  %v42 = vmul.f32 %v14, -7.874841
  %v43 = vmul.f32 %v15, -7.874841
  %v44 = vadd.f32 %v40, %v42
  %v45 = vadd.f32 %v41, %v43
  %v46 = vmul.f32 %v44, 1.442695
  %v47 = vpow.pop %v46
  %v48 = vmul.f32 %v45, 1.442695
  %v49 = vpow.pop %v48
  %v50 = vmax.f32 %v47, 0.0
  %v51 = vmax.f32 %v49, 0.0
  %v52 = vmin.f32 %v50, 1.0
  %v53 = vmin.f32 %v51, 1.0
  %s54 = scalar_lea.vmem %s1, 2
  %55 = vst [vmem:[%s54] sm:$0x3] %v52
  %56 = vst [vmem:[%s54 + $0x6] sm:$0x3] %v53
  %v57 = vmul.f32 %v8, -4.006498
  %v58 = vmul.f32 %v9, -4.006498
  %v59 = vmul.f32 %v11, -1.5197061
  %v60 = vmul.f32 %v12, -1.5197061
  %v61 = vadd.f32 %v57, %v59
  %v62 = vadd.f32 %v58, %v60
  %v63 = vmul.f32 %v14, -10.776098
  %v64 = vmul.f32 %v15, -10.776098
  %v65 = vadd.f32 %v61, %v63
  %v66 = vadd.f32 %v62, %v64
  %v67 = vmul.f32 %v65, 1.442695
  %v68 = vpow.pop %v67
  %v69 = vmul.f32 %v66, 1.442695
  %v70 = vpow.pop %v69
  %v71 = vmax.f32 %v68, 0.0
  %v72 = vmax.f32 %v70, 0.0
  %v73 = vmin.f32 %v71, 1.0
  %v74 = vmin.f32 %v72, 1.0
  %s75 = scalar_lea.vmem %s1, 4
  %76 = vst [vmem:[%s75] sm:$0x3] %v73
  %77 = vst [vmem:[%s75 + $0x6] sm:$0x3] %v74
  // Predicated region
  $region6: #{hed2rgb.1} parent=0 // pred_check
    _
  $region7: #{hed2rgb.1} parent=0 // pred_check_branch
    %79 = sbr.rel (0) target = $region9
  $region8: #{hed2rgb.1} parent=0 // pred_region
    _
  $region9: #{hed2rgb.1} parent=0 // pred_fallthru
    _
  // Predicated region
  $region10: #{hed2rgb.1} parent=0 // pred_check
    _
  $region11: #{hed2rgb.1} parent=0 // pred_check_branch
    %81 = sbr.rel (0) target = $region13
  $region12: #{hed2rgb.1} parent=0 // pred_region
    _
  $region13: #{hed2rgb.1} parent=0 // pred_fallthru
    _

</llo_original>
